<compile_context>
chip_gen: v6e
topology: v6e:2x2x1
jax: 0.10.0
libtpu: 0.0.40
codegen_flags: <defaults>
</compile_context>

<pallas_src>
import jax
import jax.numpy as jnp
from jax import lax
from jax.experimental import pallas as pl
from jax.experimental.pallas import tpu as pltpu


def _normal_head_kernel(
    x_ref,                            # (1, C_in, TT)  native NCT tile
    w1_ref, b1_ref, s1_ref, t1_ref,   # conv1 weight (C_in,C1), bias/bn as (C1,1)
    w2_ref, b2_ref, s2_ref, t2_ref,   # conv2 weight (C1,C2),  bias/bn as (C2,1)
    w3_ref, b3_ref,                   # conv3 weight (C2,1), bias (1,1)
    o_ref,                            # (1, SLAB_C, TT) fused channel-major slab
):
    c1 = w1_ref.shape[1]
    c2 = w2_ref.shape[1]
    slab_c = o_ref.shape[1]
    tt = o_ref.shape[2]

    x = x_ref[0]                                                    # (C_in, TT)

    # conv1: contract channel axis of w1 (C_in, C1) against x (C_in, TT).
    # Transposed-LHS contraction maps straight onto the MXU (no transpose).
    h1 = lax.dot_general(
        w1_ref[...], x, (((0,), (0,)), ((), ())),
        preferred_element_type=jnp.float32) + b1_ref[...]           # (C1, TT)
    o_ref[0, 0:c1, :] = h1.astype(o_ref.dtype)

    # bn1 (folded per-channel scale/shift, column broadcast) + relu + conv2
    a1 = jnp.maximum(h1 * s1_ref[...] + t1_ref[...], 0.0)
    h2 = lax.dot_general(
        w2_ref[...], a1, (((0,), (0,)), ((), ())),
        preferred_element_type=jnp.float32) + b2_ref[...]           # (C2, TT)
    o_ref[0, c1:c1 + c2, :] = h2.astype(o_ref.dtype)

    # bn2 + relu + conv3 (single output channel -> VPU multiply + sublane
    # reduce instead of an M=1 MXU matmul) + sigmoid
    a2 = jnp.maximum(h2 * s2_ref[...] + t2_ref[...], 0.0)
    h3 = jnp.sum(a2 * w3_ref[...], axis=0, keepdims=True) + b3_ref[...]  # (1,TT)
    o_ref[0, c1 + c2:c1 + c2 + 1, :] = jax.nn.sigmoid(h3).astype(o_ref.dtype)

    # zero the padded sublane rows so the fused slab is fully defined
    pad_c = slab_c - (c1 + c2 + 1)
    if pad_c > 0:
        o_ref[0, c1 + c2 + 1:, :] = jnp.zeros((pad_c, tt), o_ref.dtype)


def normal_head_forward(x_nct, params, *, max_tile_t=1024):
    """x_nct: (B, C_in, T) float32.  Returns [out1, out2, out3] in (B, C, T)."""
    B, C_in, T = x_nct.shape
    C1 = params["w1"].shape[1]
    C2 = params["w2"].shape[1]

    # Channel-major fused output slab: [o1 | o2 | o3 | pad] on the sublane axis.
    live = C1 + C2 + 1
    slab_c = ((live + 7) // 8) * 8

    # T tiling: one full-T tile when T is small, else 128-aligned tiles.
    if T <= max_tile_t:
        tile_t, t_pad = T, T
    else:
        tile_t = max_tile_t
        assert tile_t % 128 == 0
        t_pad = pl.cdiv(T, tile_t) * tile_t

    x_p = x_nct if t_pad == T else jnp.pad(
        x_nct, ((0, 0), (0, 0), (0, t_pad - T)))

    # Fold BatchNorm (eval mode) into per-channel scale/shift (plain-JAX glue).
    eps = 1e-5
    s1 = params["bn1_gamma"] / jnp.sqrt(params["bn1_var"] + eps)
    t1 = params["bn1_beta"] - params["bn1_mean"] * s1
    s2 = params["bn2_gamma"] / jnp.sqrt(params["bn2_var"] + eps)
    t2 = params["bn2_beta"] - params["bn2_mean"] * s2

    def col(v):  # (C,) -> (C, 1) column (per-sublane broadcast in the kernel)
        return v.reshape(-1, 1).astype(jnp.float32)

    grid = (B, t_pad // tile_t)

    def const(shape):  # constant parameter block (block index never changes)
        return pl.BlockSpec(shape, lambda b, t: (0, 0))

    slab = pl.pallas_call(
        _normal_head_kernel,
        out_shape=jax.ShapeDtypeStruct((B, slab_c, t_pad), jnp.float32),
        grid_spec=pltpu.PrefetchScalarGridSpec(
            num_scalar_prefetch=0,
            grid=grid,
            in_specs=[
                pl.BlockSpec((1, C_in, tile_t), lambda b, t: (b, 0, t)),  # x NCT
                const((C_in, C1)), const((C1, 1)), const((C1, 1)), const((C1, 1)),
                const((C1, C2)), const((C2, 1)), const((C2, 1)), const((C2, 1)),
                const((C2, 1)), const((1, 1)),
            ],
            out_specs=pl.BlockSpec((1, slab_c, tile_t), lambda b, t: (b, 0, t)),
        ),
        compiler_params=pltpu.CompilerParams(
            dimension_semantics=("parallel", "parallel"),
        ),
    )(
        x_p,
        params["w1"].astype(jnp.float32), col(params["b1"]), col(s1), col(t1),
        params["w2"].astype(jnp.float32), col(params["b2"]), col(s2), col(t2),
        params["w3"].astype(jnp.float32), col(params["b3"]),
    )

    # The slab is already channel-major (B, C, T): just slice channels / time.
    o1 = slab[:, 0:C1, :T]
    o2 = slab[:, C1:C1 + C2, :T]
    o3 = slab[:, C1 + C2:C1 + C2 + 1, :T]
    return [o1, o2, o3]


def make_params(key, in_channel=512, ratios=(16, 32)):
    c1 = in_channel // ratios[0]   # 32
    c2 = in_channel // ratios[1]   # 16
    keys = jax.random.split(key, 8)
    scale = 0.05
    p = {
        # conv weights stored transposed: (C_in, C_out)
        "w1": scale * jax.random.normal(keys[0], (in_channel, c1), jnp.float32),
        "b1": scale * jax.random.normal(keys[1], (c1,), jnp.float32),
        "w2": scale * jax.random.normal(keys[2], (c1, c2), jnp.float32),
        "b2": scale * jax.random.normal(keys[3], (c2,), jnp.float32),
        "w3": scale * jax.random.normal(keys[4], (c2, 1), jnp.float32),
        "b3": scale * jax.random.normal(keys[5], (1,), jnp.float32),
        # BatchNorm params (eval-mode running stats + affine)
        "bn1_gamma": 1.0 + 0.1 * jax.random.normal(keys[6], (c1,), jnp.float32),
        "bn1_beta": jnp.linspace(-0.1, 0.1, c1, dtype=jnp.float32),
        "bn1_mean": jnp.linspace(-0.05, 0.05, c1, dtype=jnp.float32),
        "bn1_var": jnp.ones((c1,), jnp.float32) * 1.2,
        "bn2_gamma": 1.0 + 0.1 * jax.random.normal(keys[7], (c2,), jnp.float32),
        "bn2_beta": jnp.linspace(-0.1, 0.1, c2, dtype=jnp.float32),
        "bn2_mean": jnp.linspace(-0.05, 0.05, c2, dtype=jnp.float32),
        "bn2_var": jnp.ones((c2,), jnp.float32) * 0.9,
    }
    return p


def reference_forward(x_nct, params):
    """Plain-JAX reference replicating NormalHead.forward (eval-mode BN)."""
    eps = 1e-5

    def conv1x1(x, w, b):  # x: (B, Cin, T), w: (Cin, Cout)
        return jnp.einsum("bct,cd->bdt", x, w) + b[None, :, None]

    def bn(x, g, be, m, v):
        return (x - m[None, :, None]) / jnp.sqrt(v[None, :, None] + eps) * \
            g[None, :, None] + be[None, :, None]

    o1 = conv1x1(x_nct, params["w1"], params["b1"])
    a1 = jax.nn.relu(bn(o1, params["bn1_gamma"], params["bn1_beta"],
                        params["bn1_mean"], params["bn1_var"]))
    o2 = conv1x1(a1, params["w2"], params["b2"])
    a2 = jax.nn.relu(bn(o2, params["bn2_gamma"], params["bn2_beta"],
                        params["bn2_mean"], params["bn2_var"]))
    o3 = jax.nn.sigmoid(conv1x1(a2, params["w3"].reshape(-1, 1), params["b3"]))
    return [o1, o2, o3]


def _check(x, params, **kw):
    outs = jax.block_until_ready(normal_head_forward(x, params, **kw))
    refs = reference_forward(x, params)
    for o, r in zip(outs, refs):
        assert o.shape == r.shape, (o.shape, r.shape)
        assert jnp.allclose(o, r, atol=1e-4, rtol=1e-4), float(
            jnp.max(jnp.abs(o - r)))
    return outs


if __name__ == "__main__":
    key = jax.random.PRNGKey(0)
    k_x1, k_x2, k_p = jax.random.split(key, 3)

    B, C_IN = 2, 512   # x: BN * C * T (PyTorch NCT)
    params = make_params(k_p, in_channel=C_IN, ratios=(16, 32))

    # Small full-T-tile path.
    T = 16
    x = jax.random.normal(k_x1, (B, C_IN, T), jnp.float32)
    outs = _check(x, params)
    assert outs[0].shape == (B, C_IN // 16, T)
    assert outs[1].shape == (B, C_IN // 32, T)
    assert outs[2].shape == (B, 1, T)

    # Tiled + padded-T path (forces tile_t=128, t_pad=256, grid=(B, 2)).
    T2 = 200
    x2 = jax.random.normal(k_x2, (B, C_IN, T2), jnp.float32)
    _check(x2, params, max_tile_t=128)

    print("KERNEL_OK")
</pallas_src>

<mosaic_0001>
module attributes {stable_mosaic.version = 11 : i64} {
  func.func @_normal_head_kernel(%arg0: i32, %arg1: i32, %arg2: memref<1x512x16xf32, #tpu.memory_space<vmem>>, %arg3: memref<512x32xf32, #tpu.memory_space<vmem>>, %arg4: memref<32x1xf32, #tpu.memory_space<vmem>>, %arg5: memref<32x1xf32, #tpu.memory_space<vmem>>, %arg6: memref<32x1xf32, #tpu.memory_space<vmem>>, %arg7: memref<32x16xf32, #tpu.memory_space<vmem>>, %arg8: memref<16x1xf32, #tpu.memory_space<vmem>>, %arg9: memref<16x1xf32, #tpu.memory_space<vmem>>, %arg10: memref<16x1xf32, #tpu.memory_space<vmem>>, %arg11: memref<16x1xf32, #tpu.memory_space<vmem>>, %arg12: memref<1x1xf32, #tpu.memory_space<vmem>>, %arg13: memref<1x56x16xf32, #tpu.memory_space<vmem>>) attributes {dimension_semantics = [#tpu.dimension_semantics<parallel>, #tpu.dimension_semantics<parallel>], iteration_bounds = array<i64: 2, 1>, scalar_prefetch = 0 : i64, scratch_operands = 0 : i64, tpu.core_type = #tpu.core_type<tc>, window_params = [{transform_indices = @transform_0, window_bounds = array<i64: 1, 512, 16>}, {pipeline_mode = #tpu.pipeline_mode<synchronous>, transform_indices = @transform_1, window_bounds = array<i64: 512, 32>}, {pipeline_mode = #tpu.pipeline_mode<synchronous>, transform_indices = @transform_2, window_bounds = array<i64: 32, 1>}, {pipeline_mode = #tpu.pipeline_mode<synchronous>, transform_indices = @transform_3, window_bounds = array<i64: 32, 1>}, {pipeline_mode = #tpu.pipeline_mode<synchronous>, transform_indices = @transform_4, window_bounds = array<i64: 32, 1>}, {pipeline_mode = #tpu.pipeline_mode<synchronous>, transform_indices = @transform_5, window_bounds = array<i64: 32, 16>}, {pipeline_mode = #tpu.pipeline_mode<synchronous>, transform_indices = @transform_6, window_bounds = array<i64: 16, 1>}, {pipeline_mode = #tpu.pipeline_mode<synchronous>, transform_indices = @transform_7, window_bounds = array<i64: 16, 1>}, {pipeline_mode = #tpu.pipeline_mode<synchronous>, transform_indices = @transform_8, window_bounds = array<i64: 16, 1>}, {pipeline_mode = #tpu.pipeline_mode<synchronous>, transform_indices = @transform_9, window_bounds = array<i64: 16, 1>}, {pipeline_mode = #tpu.pipeline_mode<synchronous>, transform_indices = @transform_10, window_bounds = array<i64: 1, 1>}, {transform_indices = @transform_11, window_bounds = array<i64: 1, 56, 16>}]} {
    %c0 = arith.constant 0 : index
    %c0_0 = arith.constant 0 : index
    %c0_1 = arith.constant 0 : index
    %0 = vector.load %arg2[%c0, %c0_0, %c0_1] : memref<1x512x16xf32, #tpu.memory_space<vmem>>, vector<1x512x16xf32>
    %1 = vector.shape_cast %0 : vector<1x512x16xf32> to vector<512x16xf32>
    %c0_2 = arith.constant 0 : index
    %c0_3 = arith.constant 0 : index
    %2 = vector.load %arg3[%c0_2, %c0_3] : memref<512x32xf32, #tpu.memory_space<vmem>>, vector<512x32xf32>
    %cst = arith.constant dense<0.000000e+00> : vector<32x16xf32>
    %3 = tpu.matmul %2, %1, %cst {dimension_numbers = #tpu.dot_dimension_numbers<[0], [0], [1], [1], [0, 1, 1, 1], [], []>} : vector<512x32xf32>, vector<512x16xf32>, vector<32x16xf32> -> vector<32x16xf32>
    %c0_4 = arith.constant 0 : index
    %c0_5 = arith.constant 0 : index
    %4 = vector.load %arg4[%c0_4, %c0_5] : memref<32x1xf32, #tpu.memory_space<vmem>>, vector<32x1xf32>
    %5 = vector.broadcast %4 : vector<32x1xf32> to vector<32x16xf32>
    %6 = arith.addf %3, %5 : vector<32x16xf32>
    %c0_6 = arith.constant 0 : index
    %c0_7 = arith.constant 0 : index
    %c0_8 = arith.constant 0 : index
    %7 = vector.load %arg13[%c0_6, %c0_7, %c0_8] : memref<1x56x16xf32, #tpu.memory_space<vmem>>, vector<1x32x16xf32>
    %8 = vector.shape_cast %7 : vector<1x32x16xf32> to vector<32x16xf32>
    %9 = vector.shape_cast %6 : vector<32x16xf32> to vector<1x32x16xf32>
    tpu.vector_store %arg13[%c0_6, %c0_7, %c0_8], %9 {strides = array<i32>} : memref<1x56x16xf32, #tpu.memory_space<vmem>>, vector<1x32x16xf32>,
    %c0_9 = arith.constant 0 : index
    %c0_10 = arith.constant 0 : index
    %10 = vector.load %arg5[%c0_9, %c0_10] : memref<32x1xf32, #tpu.memory_space<vmem>>, vector<32x1xf32>
    %11 = vector.broadcast %10 : vector<32x1xf32> to vector<32x16xf32>
    %12 = arith.mulf %6, %11 : vector<32x16xf32>
    %c0_11 = arith.constant 0 : index
    %c0_12 = arith.constant 0 : index
    %13 = vector.load %arg6[%c0_11, %c0_12] : memref<32x1xf32, #tpu.memory_space<vmem>>, vector<32x1xf32>
    %14 = vector.broadcast %13 : vector<32x1xf32> to vector<32x16xf32>
    %15 = arith.addf %12, %14 : vector<32x16xf32>
    %cst_13 = arith.constant 0.000000e+00 : f32
    %16 = vector.broadcast %cst_13 : f32 to vector<32x16xf32>
    %17 = arith.maximumf %15, %16 : vector<32x16xf32>
    %c0_14 = arith.constant 0 : index
    %c0_15 = arith.constant 0 : index
    %18 = vector.load %arg7[%c0_14, %c0_15] : memref<32x16xf32, #tpu.memory_space<vmem>>, vector<32x16xf32>
    %cst_16 = arith.constant dense<0.000000e+00> : vector<16x16xf32>
    %19 = tpu.matmul %18, %17, %cst_16 {dimension_numbers = #tpu.dot_dimension_numbers<[0], [0], [1], [1], [0, 1, 1, 1], [], []>} : vector<32x16xf32>, vector<32x16xf32>, vector<16x16xf32> -> vector<16x16xf32>
    %c0_17 = arith.constant 0 : index
    %c0_18 = arith.constant 0 : index
    %20 = vector.load %arg8[%c0_17, %c0_18] : memref<16x1xf32, #tpu.memory_space<vmem>>, vector<16x1xf32>
    %21 = vector.broadcast %20 : vector<16x1xf32> to vector<16x16xf32>
    %22 = arith.addf %19, %21 : vector<16x16xf32>
    %c0_19 = arith.constant 0 : index
    %c32 = arith.constant 32 : index
    %c0_20 = arith.constant 0 : index
    %23 = vector.load %arg13[%c0_19, %c32, %c0_20] : memref<1x56x16xf32, #tpu.memory_space<vmem>>, vector<1x16x16xf32>
    %24 = vector.shape_cast %23 : vector<1x16x16xf32> to vector<16x16xf32>
    %25 = vector.shape_cast %22 : vector<16x16xf32> to vector<1x16x16xf32>
    tpu.vector_store %arg13[%c0_19, %c32, %c0_20], %25 {strides = array<i32>} : memref<1x56x16xf32, #tpu.memory_space<vmem>>, vector<1x16x16xf32>,
    %c0_21 = arith.constant 0 : index
    %c0_22 = arith.constant 0 : index
    %26 = vector.load %arg9[%c0_21, %c0_22] : memref<16x1xf32, #tpu.memory_space<vmem>>, vector<16x1xf32>
    %27 = vector.broadcast %26 : vector<16x1xf32> to vector<16x16xf32>
    %28 = arith.mulf %22, %27 : vector<16x16xf32>
    %c0_23 = arith.constant 0 : index
    %c0_24 = arith.constant 0 : index
    %29 = vector.load %arg10[%c0_23, %c0_24] : memref<16x1xf32, #tpu.memory_space<vmem>>, vector<16x1xf32>
    %30 = vector.broadcast %29 : vector<16x1xf32> to vector<16x16xf32>
    %31 = arith.addf %28, %30 : vector<16x16xf32>
    %cst_25 = arith.constant 0.000000e+00 : f32
    %32 = vector.broadcast %cst_25 : f32 to vector<16x16xf32>
    %33 = arith.maximumf %31, %32 : vector<16x16xf32>
    %c0_26 = arith.constant 0 : index
    %c0_27 = arith.constant 0 : index
    %34 = vector.load %arg11[%c0_26, %c0_27] : memref<16x1xf32, #tpu.memory_space<vmem>>, vector<16x1xf32>
    %35 = vector.broadcast %34 : vector<16x1xf32> to vector<16x16xf32>
    %36 = arith.mulf %33, %35 : vector<16x16xf32>
    %cst_28 = arith.constant dense<0.000000e+00> : vector<16xf32>
    %37 = vector.multi_reduction <add>, %36, %cst_28 [0] : vector<16x16xf32> to vector<16xf32>
    %38 = vector.shape_cast %37 : vector<16xf32> to vector<1x16xf32>
    %c0_29 = arith.constant 0 : index
    %c0_30 = arith.constant 0 : index
    %39 = vector.load %arg12[%c0_29, %c0_30] : memref<1x1xf32, #tpu.memory_space<vmem>>, vector<1x1xf32>
    %40 = vector.broadcast %39 : vector<1x1xf32> to vector<1x16xf32>
    %41 = arith.addf %38, %40 : vector<1x16xf32>
    %42 = arith.negf %41 : vector<1x16xf32>
    %43 = math.exp %42 : vector<1x16xf32>
    %cst_31 = arith.constant 1.000000e+00 : f32
    %44 = vector.broadcast %cst_31 : f32 to vector<1x16xf32>
    %45 = arith.addf %44, %43 : vector<1x16xf32>
    %46 = arith.divf %44, %45 : vector<1x16xf32>
    %c0_32 = arith.constant 0 : index
    %c48 = arith.constant 48 : index
    %c0_33 = arith.constant 0 : index
    %47 = vector.load %arg13[%c0_32, %c48, %c0_33] : memref<1x56x16xf32, #tpu.memory_space<vmem>>, vector<1x1x16xf32>
    %48 = vector.shape_cast %47 : vector<1x1x16xf32> to vector<1x16xf32>
    %49 = vector.shape_cast %46 : vector<1x16xf32> to vector<1x1x16xf32>
    tpu.vector_store %arg13[%c0_32, %c48, %c0_33], %49 {strides = array<i32>} : memref<1x56x16xf32, #tpu.memory_space<vmem>>, vector<1x1x16xf32>,
    %cst_34 = arith.constant 0.000000e+00 : f32
    %50 = vector.broadcast %cst_34 : f32 to vector<7x16xf32>
    %c0_35 = arith.constant 0 : index
    %c49 = arith.constant 49 : index
    %c0_36 = arith.constant 0 : index
    %51 = vector.load %arg13[%c0_35, %c49, %c0_36] : memref<1x56x16xf32, #tpu.memory_space<vmem>>, vector<1x7x16xf32>
    %52 = vector.shape_cast %51 : vector<1x7x16xf32> to vector<7x16xf32>
    %53 = vector.shape_cast %50 : vector<7x16xf32> to vector<1x7x16xf32>
    tpu.vector_store %arg13[%c0_35, %c49, %c0_36], %53 {strides = array<i32>} : memref<1x56x16xf32, #tpu.memory_space<vmem>>, vector<1x7x16xf32>,
    return
  }
  func.func @transform_0(%arg0: i32, %arg1: i32) -> (i32, i32, i32) {
    %c0_i32 = arith.constant 0 : i32
    %c0_i32_0 = arith.constant 0 : i32
    return %arg0, %c0_i32, %arg1 : i32, i32, i32
  }
  func.func @transform_1(%arg0: i32, %arg1: i32) -> (i32, i32) {
    %c0_i32 = arith.constant 0 : i32
    %c0_i32_0 = arith.constant 0 : i32
    %c0_i32_1 = arith.constant 0 : i32
    return %c0_i32, %c0_i32_0 : i32, i32
  }
  func.func @transform_2(%arg0: i32, %arg1: i32) -> (i32, i32) {
    %c0_i32 = arith.constant 0 : i32
    %c0_i32_0 = arith.constant 0 : i32
    %c0_i32_1 = arith.constant 0 : i32
    return %c0_i32, %c0_i32_0 : i32, i32
  }
  func.func @transform_3(%arg0: i32, %arg1: i32) -> (i32, i32) {
    %c0_i32 = arith.constant 0 : i32
    %c0_i32_0 = arith.constant 0 : i32
    %c0_i32_1 = arith.constant 0 : i32
    return %c0_i32, %c0_i32_0 : i32, i32
  }
  func.func @transform_4(%arg0: i32, %arg1: i32) -> (i32, i32) {
    %c0_i32 = arith.constant 0 : i32
    %c0_i32_0 = arith.constant 0 : i32
    %c0_i32_1 = arith.constant 0 : i32
    return %c0_i32, %c0_i32_0 : i32, i32
  }
  func.func @transform_5(%arg0: i32, %arg1: i32) -> (i32, i32) {
    %c0_i32 = arith.constant 0 : i32
    %c0_i32_0 = arith.constant 0 : i32
    %c0_i32_1 = arith.constant 0 : i32
    return %c0_i32, %c0_i32_0 : i32, i32
  }
  func.func @transform_6(%arg0: i32, %arg1: i32) -> (i32, i32) {
    %c0_i32 = arith.constant 0 : i32
    %c0_i32_0 = arith.constant 0 : i32
    %c0_i32_1 = arith.constant 0 : i32
    return %c0_i32, %c0_i32_0 : i32, i32
  }
  func.func @transform_7(%arg0: i32, %arg1: i32) -> (i32, i32) {
    %c0_i32 = arith.constant 0 : i32
    %c0_i32_0 = arith.constant 0 : i32
    %c0_i32_1 = arith.constant 0 : i32
    return %c0_i32, %c0_i32_0 : i32, i32
  }
  func.func @transform_8(%arg0: i32, %arg1: i32) -> (i32, i32) {
    %c0_i32 = arith.constant 0 : i32
    %c0_i32_0 = arith.constant 0 : i32
    %c0_i32_1 = arith.constant 0 : i32
    return %c0_i32, %c0_i32_0 : i32, i32
  }
  func.func @transform_9(%arg0: i32, %arg1: i32) -> (i32, i32) {
    %c0_i32 = arith.constant 0 : i32
    %c0_i32_0 = arith.constant 0 : i32
    %c0_i32_1 = arith.constant 0 : i32
    return %c0_i32, %c0_i32_0 : i32, i32
  }
  func.func @transform_10(%arg0: i32, %arg1: i32) -> (i32, i32) {
    %c0_i32 = arith.constant 0 : i32
    %c0_i32_0 = arith.constant 0 : i32
    %c0_i32_1 = arith.constant 0 : i32
    return %c0_i32, %c0_i32_0 : i32, i32
  }
  func.func @transform_11(%arg0: i32, %arg1: i32) -> (i32, i32, i32) {
    %c0_i32 = arith.constant 0 : i32
    %c0_i32_0 = arith.constant 0 : i32
    return %arg0, %c0_i32, %arg1 : i32, i32, i32
  }
}

</mosaic_0001>

<llo_original>
// kernel: tpu_custom_call.1
$region0: #{tpu_custom_call.1}
  #allocation0 [shape = 'u32[]', space=smem, size = 0x4, offset = 0x4, fixed_abs, tag = 'smem constant byte address 0x4 - core index']
  #allocation1 [shape = 'u32[144,128]{1,0:T(1,128)}', space=vmem, size = 0x12000, scoped, tag = 'internal scratch']
  #allocation2 [shape = 'f32[1,1]{1,0:T(1,128)S(1)}', space=vmem, size = 0x200, scoped, tag = 'scoped memory for tpu_custom_call.1']
  %s0 = inlined_call_operand.vmem [shape: f32[2,512,16], index: 0, kind: input, shape index: {}]
  %s1 = inlined_call_operand.vmem [shape: f32[512,32], index: 1, kind: input, shape index: {}]
  %s2 = inlined_call_operand.vmem [shape: f32[32,1], index: 2, kind: input, shape index: {}]
  %s3 = inlined_call_operand.vmem [shape: f32[32,1], index: 3, kind: input, shape index: {}]
  %s4 = inlined_call_operand.vmem [shape: f32[32,1], index: 4, kind: input, shape index: {}]
  %s5 = inlined_call_operand.vmem [shape: f32[32,16], index: 5, kind: input, shape index: {}]
  %s6 = inlined_call_operand.vmem [shape: f32[16,1], index: 6, kind: input, shape index: {}]
  %s7 = inlined_call_operand.vmem [shape: f32[16,1], index: 7, kind: input, shape index: {}]
  %s8 = inlined_call_operand.vmem [shape: f32[16,1], index: 8, kind: input, shape index: {}]
  %s9 = inlined_call_operand.vmem [shape: f32[16,1], index: 9, kind: input, shape index: {}]
  %s10 = inlined_call_operand.<no memory space> [shape: f32[1,1], index: 10, kind: input, shape index: {}]
  %s11 = inlined_call_operand.vmem [shape: f32[2,56,16], index: 11, kind: output, shape index: {}]
  %s12 = sld [smem:[#allocation0]]
  $region77: #{tpu_custom_call.1} parent=0
    _
  %s14 = ssub.s32 1, %s12
  %s15 = scalar_select 0, %s14, %s12
  %v16 = vstv %s10
  %17 = vst [vmem:[#allocation2] sm:$0x1] %v16
  loop: start=0, step=1, limit=4
  $region2: #{tpu_custom_call.1} parent=0 // loop_pre_header
    _
  $region3: #{tpu_custom_call.1} parent=0 // loop_header
    %s19 = sphi 0, %s23
    %p20 = scmp.ge.s32.totalorder %s19, 4
    %s26 = sphi 0, %s38
    %s27 = sphi 0, %s34
    %s28 = sphi 0, %s26
    %s29 = sphi 0, %s27
    %s30 = sphi 0, %s28
    %s31 = sphi 0, %s29
    %s43 = sphi 0, %s45
    %s46 = sphi 0, %s43
    %s47 = sphi 0, %s46
    %s63 = sphi 0, %s47
    %s67 = sphi 0, %s67
    %s69 = sphi 0, %s67
    %s70 = sphi 0, %s69
    %s84 = sphi 0, %s70
    %s88 = sphi 0, %s88
    %s90 = sphi 0, %s88
    %s91 = sphi 0, %s90
    %s105 = sphi 0, %s91
    %s109 = sphi 0, %s109
    %s111 = sphi 0, %s109
    %s112 = sphi 0, %s111
    %s126 = sphi 0, %s112
    %s130 = sphi 0, %s130
    %s132 = sphi 0, %s130
    %s133 = sphi 0, %s132
    %s147 = sphi 0, %s133
    %s151 = sphi 0, %s151
    %s153 = sphi 0, %s151
    %s154 = sphi 0, %s153
    %s168 = sphi 0, %s154
    %s172 = sphi 0, %s172
    %s174 = sphi 0, %s172
    %s175 = sphi 0, %s174
    %s189 = sphi 0, %s175
    %s193 = sphi 0, %s193
    %s195 = sphi 0, %s193
    %s196 = sphi 0, %s195
    %s210 = sphi 0, %s196
    %s214 = sphi 0, %s214
    %s216 = sphi 0, %s214
    %s217 = sphi 0, %s216
    %s231 = sphi 0, %s217
    %s235 = sphi 0, %s235
    %s237 = sphi 0, %s235
    %s238 = sphi 0, %s237
    %s252 = sphi 0, %s238
    %s256 = sphi 0, %s256
    %s258 = sphi 0, %s256
    %s259 = sphi 0, %s258
    %s273 = sphi 0, %s259
    %s281 = sphi 0, %s283
    %s284 = sphi 0, %s281
    %s285 = sphi 0, %s284
    %s301 = sphi 0, %s285
  $region4: #{tpu_custom_call.1} parent=0 // loop_header_branch
    %22 = sbr.rel (%p20) target = $region8
  $region5: #{tpu_custom_call.1} parent=0 // loop_body
    %s24 = ssub.s32 %s19, 1
    %s25 = ssub.s32 %s19, 2
    %s32 = sadd.s32 1, %s27
    %p33 = scmp.ge.s32.totalorder %s32, 1
    %s34 = scalar_select %p33, 0, %s32
    %s35 = sadd.s32 1, %s26
    %s36 = scalar_select %p33, %s35, %s26
    %p37 = scmp.ge.s32.totalorder %s36, 2
    %s38 = scalar_select %p37, 0, %s36
    %s39 = ssub.s32 %s26, %s38
    %s40 = ssub.s32 %s27, %s34
    %s41 = sor.u32 %s39, %s40
    %p42 = scmp.eq.s32.totalorder %s41, 0
    %s44 = sadd.s32 %s43, 1
    %s45 = scalar_select %p42, %s43, %s44
    %p48 = pneg %p42
    %p49 = scmp.eq.s32.totalorder %s19, 1
    %p50 = por %p48, %p49
    %p51 = scmp.ne.s32.totalorder %s43, %s46
    %p52 = scmp.eq.s32.totalorder %s19, 0
    %p53 = por %p51, %p52
    %p54 = scmp.ne.s32.totalorder %s43, %s46
    %p55 = scmp.eq.s32.totalorder %s24, 1
    %p56 = por %p54, %p55
    %p57 = scmp.ne.s32.totalorder %s46, %s47
    %p58 = scmp.eq.s32.totalorder %s24, 0
    %p59 = por %p57, %p58
    %p60 = scmp.ne.s32.totalorder %s46, %s47
    %p61 = scmp.eq.s32.totalorder %s25, 1
    %p62 = por %p60, %p61
    %p64 = scmp.ne.s32.totalorder %s47, %s63
    %p65 = scmp.eq.s32.totalorder %s25, 0
    %p66 = por %p64, %p65
    %s68 = sadd.s32 %s67, 1
    %p71 = scmp.eq.s32.totalorder %s19, 1
    %p72 = scmp.ne.s32.totalorder %s67, %s69
    %p73 = scmp.eq.s32.totalorder %s19, 0
    %p74 = por %p72, %p73
    %p75 = scmp.ne.s32.totalorder %s67, %s69
    %p76 = scmp.eq.s32.totalorder %s24, 1
    %p77 = por %p75, %p76
    %p78 = scmp.ne.s32.totalorder %s69, %s70
    %p79 = scmp.eq.s32.totalorder %s24, 0
    %p80 = por %p78, %p79
    %p81 = scmp.ne.s32.totalorder %s69, %s70
    %p82 = scmp.eq.s32.totalorder %s25, 1
    %p83 = por %p81, %p82
    %p85 = scmp.ne.s32.totalorder %s70, %s84
    %p86 = scmp.eq.s32.totalorder %s25, 0
    %p87 = por %p85, %p86
    %s89 = sadd.s32 %s88, 1
    %p92 = scmp.eq.s32.totalorder %s19, 1
    %p93 = scmp.ne.s32.totalorder %s88, %s90
    %p94 = scmp.eq.s32.totalorder %s19, 0
    %p95 = por %p93, %p94
    %p96 = scmp.ne.s32.totalorder %s88, %s90
    %p97 = scmp.eq.s32.totalorder %s24, 1
    %p98 = por %p96, %p97
    %p99 = scmp.ne.s32.totalorder %s90, %s91
    %p100 = scmp.eq.s32.totalorder %s24, 0
    %p101 = por %p99, %p100
    %p102 = scmp.ne.s32.totalorder %s90, %s91
    %p103 = scmp.eq.s32.totalorder %s25, 1
    %p104 = por %p102, %p103
    %p106 = scmp.ne.s32.totalorder %s91, %s105
    %p107 = scmp.eq.s32.totalorder %s25, 0
    %p108 = por %p106, %p107
    %s110 = sadd.s32 %s109, 1
    %p113 = scmp.eq.s32.totalorder %s19, 1
    %p114 = scmp.ne.s32.totalorder %s109, %s111
    %p115 = scmp.eq.s32.totalorder %s19, 0
    %p116 = por %p114, %p115
    %p117 = scmp.ne.s32.totalorder %s109, %s111
    %p118 = scmp.eq.s32.totalorder %s24, 1
    %p119 = por %p117, %p118
    %p120 = scmp.ne.s32.totalorder %s111, %s112
    %p121 = scmp.eq.s32.totalorder %s24, 0
    %p122 = por %p120, %p121
    %p123 = scmp.ne.s32.totalorder %s111, %s112
    %p124 = scmp.eq.s32.totalorder %s25, 1
    %p125 = por %p123, %p124
    %p127 = scmp.ne.s32.totalorder %s112, %s126
    %p128 = scmp.eq.s32.totalorder %s25, 0
    %p129 = por %p127, %p128
    %s131 = sadd.s32 %s130, 1
    %p134 = scmp.eq.s32.totalorder %s19, 1
    %p135 = scmp.ne.s32.totalorder %s130, %s132
    %p136 = scmp.eq.s32.totalorder %s19, 0
    %p137 = por %p135, %p136
    %p138 = scmp.ne.s32.totalorder %s130, %s132
    %p139 = scmp.eq.s32.totalorder %s24, 1
    %p140 = por %p138, %p139
    %p141 = scmp.ne.s32.totalorder %s132, %s133
    %p142 = scmp.eq.s32.totalorder %s24, 0
    %p143 = por %p141, %p142
    %p144 = scmp.ne.s32.totalorder %s132, %s133
    %p145 = scmp.eq.s32.totalorder %s25, 1
    %p146 = por %p144, %p145
    %p148 = scmp.ne.s32.totalorder %s133, %s147
    %p149 = scmp.eq.s32.totalorder %s25, 0
    %p150 = por %p148, %p149
    %s152 = sadd.s32 %s151, 1
    %p155 = scmp.eq.s32.totalorder %s19, 1
    %p156 = scmp.ne.s32.totalorder %s151, %s153
    %p157 = scmp.eq.s32.totalorder %s19, 0
    %p158 = por %p156, %p157
    %p159 = scmp.ne.s32.totalorder %s151, %s153
    %p160 = scmp.eq.s32.totalorder %s24, 1
    %p161 = por %p159, %p160
    %p162 = scmp.ne.s32.totalorder %s153, %s154
    %p163 = scmp.eq.s32.totalorder %s24, 0
    %p164 = por %p162, %p163
    %p165 = scmp.ne.s32.totalorder %s153, %s154
    %p166 = scmp.eq.s32.totalorder %s25, 1
    %p167 = por %p165, %p166
    %p169 = scmp.ne.s32.totalorder %s154, %s168
    %p170 = scmp.eq.s32.totalorder %s25, 0
    %p171 = por %p169, %p170
    %s173 = sadd.s32 %s172, 1
    %p176 = scmp.eq.s32.totalorder %s19, 1
    %p177 = scmp.ne.s32.totalorder %s172, %s174
    %p178 = scmp.eq.s32.totalorder %s19, 0
    %p179 = por %p177, %p178
    %p180 = scmp.ne.s32.totalorder %s172, %s174
    %p181 = scmp.eq.s32.totalorder %s24, 1
    %p182 = por %p180, %p181
    %p183 = scmp.ne.s32.totalorder %s174, %s175
    %p184 = scmp.eq.s32.totalorder %s24, 0
    %p185 = por %p183, %p184
    %p186 = scmp.ne.s32.totalorder %s174, %s175
    %p187 = scmp.eq.s32.totalorder %s25, 1
    %p188 = por %p186, %p187
    %p190 = scmp.ne.s32.totalorder %s175, %s189
    %p191 = scmp.eq.s32.totalorder %s25, 0
    %p192 = por %p190, %p191
    %s194 = sadd.s32 %s193, 1
    %p197 = scmp.eq.s32.totalorder %s19, 1
    %p198 = scmp.ne.s32.totalorder %s193, %s195
    %p199 = scmp.eq.s32.totalorder %s19, 0
    %p200 = por %p198, %p199
    %p201 = scmp.ne.s32.totalorder %s193, %s195
    %p202 = scmp.eq.s32.totalorder %s24, 1
    %p203 = por %p201, %p202
    %p204 = scmp.ne.s32.totalorder %s195, %s196
    %p205 = scmp.eq.s32.totalorder %s24, 0
    %p206 = por %p204, %p205
    %p207 = scmp.ne.s32.totalorder %s195, %s196
    %p208 = scmp.eq.s32.totalorder %s25, 1
    %p209 = por %p207, %p208
    %p211 = scmp.ne.s32.totalorder %s196, %s210
    %p212 = scmp.eq.s32.totalorder %s25, 0
    %p213 = por %p211, %p212
    %s215 = sadd.s32 %s214, 1
    %p218 = scmp.eq.s32.totalorder %s19, 1
    %p219 = scmp.ne.s32.totalorder %s214, %s216
    %p220 = scmp.eq.s32.totalorder %s19, 0
    %p221 = por %p219, %p220
    %p222 = scmp.ne.s32.totalorder %s214, %s216
    %p223 = scmp.eq.s32.totalorder %s24, 1
    %p224 = por %p222, %p223
    %p225 = scmp.ne.s32.totalorder %s216, %s217
    %p226 = scmp.eq.s32.totalorder %s24, 0
    %p227 = por %p225, %p226
    %p228 = scmp.ne.s32.totalorder %s216, %s217
    %p229 = scmp.eq.s32.totalorder %s25, 1
    %p230 = por %p228, %p229
    %p232 = scmp.ne.s32.totalorder %s217, %s231
    %p233 = scmp.eq.s32.totalorder %s25, 0
    %p234 = por %p232, %p233
    %s236 = sadd.s32 %s235, 1
    %p239 = scmp.eq.s32.totalorder %s19, 1
    %p240 = scmp.ne.s32.totalorder %s235, %s237
    %p241 = scmp.eq.s32.totalorder %s19, 0
    %p242 = por %p240, %p241
    %p243 = scmp.ne.s32.totalorder %s235, %s237
    %p244 = scmp.eq.s32.totalorder %s24, 1
    %p245 = por %p243, %p244
    %p246 = scmp.ne.s32.totalorder %s237, %s238
    %p247 = scmp.eq.s32.totalorder %s24, 0
    %p248 = por %p246, %p247
    %p249 = scmp.ne.s32.totalorder %s237, %s238
    %p250 = scmp.eq.s32.totalorder %s25, 1
    %p251 = por %p249, %p250
    %p253 = scmp.ne.s32.totalorder %s238, %s252
    %p254 = scmp.eq.s32.totalorder %s25, 0
    %p255 = por %p253, %p254
    %s257 = sadd.s32 %s256, 1
    %p260 = scmp.eq.s32.totalorder %s19, 1
    %p261 = scmp.ne.s32.totalorder %s256, %s258
    %p262 = scmp.eq.s32.totalorder %s19, 0
    %p263 = por %p261, %p262
    %p264 = scmp.ne.s32.totalorder %s256, %s258
    %p265 = scmp.eq.s32.totalorder %s24, 1
    %p266 = por %p264, %p265
    %p267 = scmp.ne.s32.totalorder %s258, %s259
    %p268 = scmp.eq.s32.totalorder %s24, 0
    %p269 = por %p267, %p268
    %p270 = scmp.ne.s32.totalorder %s258, %s259
    %p271 = scmp.eq.s32.totalorder %s25, 1
    %p272 = por %p270, %p271
    %p274 = scmp.ne.s32.totalorder %s259, %s273
    %p275 = scmp.eq.s32.totalorder %s25, 0
    %p276 = por %p274, %p275
    %s277 = ssub.s32 %s26, %s38
    %s278 = ssub.s32 %s27, %s34
    %s279 = sor.u32 %s277, %s278
    %p280 = scmp.eq.s32.totalorder %s279, 0
    %s282 = sadd.s32 %s281, 1
    %s283 = scalar_select %p280, %s281, %s282
    %p286 = pneg %p280
    %p287 = scmp.eq.s32.totalorder %s19, 1
    %p288 = por %p286, %p287
    %p289 = scmp.ne.s32.totalorder %s281, %s284
    %p290 = scmp.eq.s32.totalorder %s19, 0
    %p291 = por %p289, %p290
    %p292 = scmp.ne.s32.totalorder %s281, %s284
    %p293 = scmp.eq.s32.totalorder %s24, 1
    %p294 = por %p292, %p293
    %p295 = scmp.ne.s32.totalorder %s284, %s285
    %p296 = scmp.eq.s32.totalorder %s24, 0
    %p297 = por %p295, %p296
    %p298 = scmp.ne.s32.totalorder %s284, %s285
    %p299 = scmp.eq.s32.totalorder %s25, 1
    %p300 = por %p298, %p299
    %p302 = scmp.ne.s32.totalorder %s285, %s301
    %p303 = scmp.eq.s32.totalorder %s25, 0
    %p304 = por %p302, %p303
    %p305 = scmp.le.s32.totalorder 1, %s19
    %p306 = scmp.lt.s32.totalorder %s19, 3
    %p307 = pnand %p305, %p306
    %p308 = pneg %p307
    // Predicated region
    $region9: #{tpu_custom_call.1} parent=5 // pred_check
      _
    $region10: #{tpu_custom_call.1} parent=5 // pred_check_branch
      %310 = sbr.rel (%p307) target = $region12
    $region11: #{tpu_custom_call.1} parent=5 // pred_region
      %s311 = ssub.s32 %s19, 1
      // Predicated region
      $region13: #{tpu_custom_call.1} parent=11 // pred_check
        %p312 = pneg %p80
      $region14: #{tpu_custom_call.1} parent=11 // pred_check_branch
        %314 = sbr.rel (%p312) target = $region16
      $region15: #{tpu_custom_call.1} parent=11 // pred_region
        _
      $region16: #{tpu_custom_call.1} parent=11 // pred_fallthru
        _
      // Predicated region
      $region17: #{tpu_custom_call.1} parent=11 // pred_check
        %p315 = pneg %p101
      $region18: #{tpu_custom_call.1} parent=11 // pred_check_branch
        %317 = sbr.rel (%p315) target = $region20
      $region19: #{tpu_custom_call.1} parent=11 // pred_region
        _
      $region20: #{tpu_custom_call.1} parent=11 // pred_fallthru
        _
      // Predicated region
      $region21: #{tpu_custom_call.1} parent=11 // pred_check
        %p318 = pneg %p122
      $region22: #{tpu_custom_call.1} parent=11 // pred_check_branch
        %320 = sbr.rel (%p318) target = $region24
      $region23: #{tpu_custom_call.1} parent=11 // pred_region
        _
      $region24: #{tpu_custom_call.1} parent=11 // pred_fallthru
        _
      // Predicated region
      $region25: #{tpu_custom_call.1} parent=11 // pred_check
        %p321 = pneg %p143
      $region26: #{tpu_custom_call.1} parent=11 // pred_check_branch
        %323 = sbr.rel (%p321) target = $region28
      $region27: #{tpu_custom_call.1} parent=11 // pred_region
        _
      $region28: #{tpu_custom_call.1} parent=11 // pred_fallthru
        _
      // Predicated region
      $region29: #{tpu_custom_call.1} parent=11 // pred_check
        %p324 = pneg %p164
      $region30: #{tpu_custom_call.1} parent=11 // pred_check_branch
        %326 = sbr.rel (%p324) target = $region32
      $region31: #{tpu_custom_call.1} parent=11 // pred_region
        _
      $region32: #{tpu_custom_call.1} parent=11 // pred_fallthru
        _
      // Predicated region
      $region33: #{tpu_custom_call.1} parent=11 // pred_check
        %p327 = pneg %p185
      $region34: #{tpu_custom_call.1} parent=11 // pred_check_branch
        %329 = sbr.rel (%p327) target = $region36
      $region35: #{tpu_custom_call.1} parent=11 // pred_region
        _
      $region36: #{tpu_custom_call.1} parent=11 // pred_fallthru
        _
      // Predicated region
      $region37: #{tpu_custom_call.1} parent=11 // pred_check
        %p330 = pneg %p206
      $region38: #{tpu_custom_call.1} parent=11 // pred_check_branch
        %332 = sbr.rel (%p330) target = $region40
      $region39: #{tpu_custom_call.1} parent=11 // pred_region
        _
      $region40: #{tpu_custom_call.1} parent=11 // pred_fallthru
        _
      // Predicated region
      $region41: #{tpu_custom_call.1} parent=11 // pred_check
        %p333 = pneg %p227
      $region42: #{tpu_custom_call.1} parent=11 // pred_check_branch
        %335 = sbr.rel (%p333) target = $region44
      $region43: #{tpu_custom_call.1} parent=11 // pred_region
        _
      $region44: #{tpu_custom_call.1} parent=11 // pred_fallthru
        _
      // Predicated region
      $region45: #{tpu_custom_call.1} parent=11 // pred_check
        %p336 = pneg %p248
      $region46: #{tpu_custom_call.1} parent=11 // pred_check_branch
        %338 = sbr.rel (%p336) target = $region48
      $region47: #{tpu_custom_call.1} parent=11 // pred_region
        _
      $region48: #{tpu_custom_call.1} parent=11 // pred_fallthru
        _
      // Predicated region
      $region49: #{tpu_custom_call.1} parent=11 // pred_check
        %p339 = pneg %p269
      $region50: #{tpu_custom_call.1} parent=11 // pred_check_branch
        %341 = sbr.rel (%p339) target = $region52
      $region51: #{tpu_custom_call.1} parent=11 // pred_region
        _
      $region52: #{tpu_custom_call.1} parent=11 // pred_fallthru
        _
    $region12: #{tpu_custom_call.1} parent=5 // pred_fallthru
      _
    %p342 = scmp.lt.s32.totalorder %s19, 2
    // Predicated region
    $region53: #{tpu_custom_call.1} parent=5 // pred_check
      %p343 = pneg %p342
    $region54: #{tpu_custom_call.1} parent=5 // pred_check_branch
      %345 = sbr.rel (%p343) target = $region56
    $region55: #{tpu_custom_call.1} parent=5 // pred_region
      // Predicated region
      $region57: #{tpu_custom_call.1} parent=55 // pred_check
        %p346 = pneg %p53
      $region58: #{tpu_custom_call.1} parent=55 // pred_check_branch
        %348 = sbr.rel (%p346) target = $region60
      $region59: #{tpu_custom_call.1} parent=55 // pred_region
        %p349 = scmp.lt.s32.totalorder %s26, 1
        %s350 = scalar_select %p349, %s26, 1
        %p351 = scmp.lt.s32.totalorder %s27, 0
        %s352 = scalar_select %p351, %s27, 0
        %s353 = smul.addr %s350, 64
        %s354 = sadd.s32 %s352, %s353
        %s355 = smul.addr %s354, 8
        %s356 = scalar_lea.vmem %s0, %s355
      $region60: #{tpu_custom_call.1} parent=55 // pred_fallthru
        _
    $region56: #{tpu_custom_call.1} parent=5 // pred_fallthru
      _
    %p357 = scmp.le.s32.totalorder 1, %s19
    %p358 = scmp.lt.s32.totalorder %s19, 3
    %p359 = pnand %p357, %p358
    %p360 = pneg %p359
    // Predicated region
    $region61: #{tpu_custom_call.1} parent=5 // pred_check
      _
    $region62: #{tpu_custom_call.1} parent=5 // pred_check_branch
      %362 = sbr.rel (%p359) target = $region64
    $region63: #{tpu_custom_call.1} parent=5 // pred_region
      %s363 = ssub.s32 %s19, 1
      %p364 = scmp.lt.s32.totalorder %s28, 1
      %s365 = scalar_select %p364, %s28, 1
      %p366 = scmp.lt.s32.totalorder %s29, 0
      %s367 = scalar_select %p366, %s29, 0
      %s368 = smul.addr %s365, 64
      %s369 = sadd.s32 %s367, %s368
      %s370 = smul.addr %s369, 8
      %s371 = scalar_lea.vmem %s0, %s370
      %p372 = pneg %p59
      %p373 = pneg %p56
      %p374 = pneg %p80
      %p375 = pneg %p77
      %p376 = pneg %p101
      %p377 = pneg %p98
      %p378 = pneg %p122
      %p379 = pneg %p119
      %p380 = pneg %p143
      %p381 = pneg %p140
      %p382 = pneg %p164
      %p383 = pneg %p161
      %p384 = pneg %p185
      %p385 = pneg %p182
      %p386 = pneg %p206
      %p387 = pneg %p203
      %p388 = pneg %p227
      %p389 = pneg %p224
      %p390 = pneg %p248
      %p391 = pneg %p245
      %p392 = pneg %p269
      %p393 = pneg %p266
      %p394 = pneg %p297
      %p395 = pneg %p294
      %p396 = scmp.lt.s32.totalorder %s28, 1
      %s397 = scalar_select %p396, %s28, 1
      %p398 = scmp.lt.s32.totalorder %s29, 0
      %s399 = scalar_select %p398, %s29, 0
      %s400 = smul.addr %s397, 7
      %s401 = sadd.s32 %s399, %s400
      %s402 = smul.addr %s401, 8
      %s403 = scalar_lea.vmem %s11, %s402
      %p404 = scmp.lt.s32.totalorder %s28, 1
      %s405 = scalar_select %p404, %s28, 1
      %p406 = scmp.lt.s32.totalorder %s29, 0
      %s407 = scalar_select %p406, %s29, 0
      %s408 = smul.addr %s405, 64
      %s409 = sadd.s32 %s407, %s408
      %s410 = smul.addr %s409, 8
      %s411 = scalar_lea.vmem %s0, %s410
      %p412 = scmp.lt.s32.totalorder %s28, 1
      %s413 = scalar_select %p412, %s28, 1
      %p414 = scmp.lt.s32.totalorder %s29, 0
      %s415 = scalar_select %p414, %s29, 0
      %s416 = smul.addr %s413, 7
      %s417 = sadd.s32 %s415, %s416
      %s418 = smul.addr %s417, 8
      %s419 = scalar_lea.vmem %s11, %s418
      %v420 = vld [vmem:[%s411] sm:$0xff]
      %v421 = vld [vmem:[%s411 + $0x8] sm:$0xff]
      %v422 = vld [vmem:[%s411 + $0x10] sm:$0xff]
      %v423 = vld [vmem:[%s411 + $0x18] sm:$0xff]
      %v424 = vld [vmem:[%s411 + $0x20] sm:$0xff]
      %v425 = vld [vmem:[%s411 + $0x28] sm:$0xff]
      %v426 = vld [vmem:[%s411 + $0x30] sm:$0xff]
      %v427 = vld [vmem:[%s411 + $0x38] sm:$0xff]
      %v428 = vld [vmem:[%s411 + $0x40] sm:$0xff]
      %v429 = vld [vmem:[%s411 + $0x48] sm:$0xff]
      %v430 = vld [vmem:[%s411 + $0x50] sm:$0xff]
      %v431 = vld [vmem:[%s411 + $0x58] sm:$0xff]
      %v432 = vld [vmem:[%s411 + $0x60] sm:$0xff]
      %v433 = vld [vmem:[%s411 + $0x68] sm:$0xff]
      %v434 = vld [vmem:[%s411 + $0x70] sm:$0xff]
      %v435 = vld [vmem:[%s411 + $0x78] sm:$0xff]
      %v436 = vld [vmem:[%s411 + $0x80] sm:$0xff]
      %v437 = vld [vmem:[%s411 + $0x88] sm:$0xff]
      %v438 = vld [vmem:[%s411 + $0x90] sm:$0xff]
      %v439 = vld [vmem:[%s411 + $0x98] sm:$0xff]
      %v440 = vld [vmem:[%s411 + $0xa0] sm:$0xff]
      %v441 = vld [vmem:[%s411 + $0xa8] sm:$0xff]
      %v442 = vld [vmem:[%s411 + $0xb0] sm:$0xff]
      %v443 = vld [vmem:[%s411 + $0xb8] sm:$0xff]
      %v444 = vld [vmem:[%s411 + $0xc0] sm:$0xff]
      %v445 = vld [vmem:[%s411 + $0xc8] sm:$0xff]
      %v446 = vld [vmem:[%s411 + $0xd0] sm:$0xff]
      %v447 = vld [vmem:[%s411 + $0xd8] sm:$0xff]
      %v448 = vld [vmem:[%s411 + $0xe0] sm:$0xff]
      %v449 = vld [vmem:[%s411 + $0xe8] sm:$0xff]
      %v450 = vld [vmem:[%s411 + $0xf0] sm:$0xff]
      %v451 = vld [vmem:[%s411 + $0xf8] sm:$0xff]
      %v452 = vld [vmem:[%s411 + $0x100] sm:$0xff]
      %v453 = vld [vmem:[%s411 + $0x108] sm:$0xff]
      %v454 = vld [vmem:[%s411 + $0x110] sm:$0xff]
      %v455 = vld [vmem:[%s411 + $0x118] sm:$0xff]
      %v456 = vld [vmem:[%s411 + $0x120] sm:$0xff]
      %v457 = vld [vmem:[%s411 + $0x128] sm:$0xff]
      %v458 = vld [vmem:[%s411 + $0x130] sm:$0xff]
      %v459 = vld [vmem:[%s411 + $0x138] sm:$0xff]
      %v460 = vld [vmem:[%s411 + $0x140] sm:$0xff]
      %v461 = vld [vmem:[%s411 + $0x148] sm:$0xff]
      %v462 = vld [vmem:[%s411 + $0x150] sm:$0xff]
      %v463 = vld [vmem:[%s411 + $0x158] sm:$0xff]
      %v464 = vld [vmem:[%s411 + $0x160] sm:$0xff]
      %v465 = vld [vmem:[%s411 + $0x168] sm:$0xff]
      %v466 = vld [vmem:[%s411 + $0x170] sm:$0xff]
      %v467 = vld [vmem:[%s411 + $0x178] sm:$0xff]
      %v468 = vld [vmem:[%s411 + $0x180] sm:$0xff]
      %v469 = vld [vmem:[%s411 + $0x188] sm:$0xff]
      %v470 = vld [vmem:[%s411 + $0x190] sm:$0xff]
      %v471 = vld [vmem:[%s411 + $0x198] sm:$0xff]
      %v472 = vld [vmem:[%s411 + $0x1a0] sm:$0xff]
      %v473 = vld [vmem:[%s411 + $0x1a8] sm:$0xff]
      %v474 = vld [vmem:[%s411 + $0x1b0] sm:$0xff]
      %v475 = vld [vmem:[%s411 + $0x1b8] sm:$0xff]
      %v476 = vld [vmem:[%s411 + $0x1c0] sm:$0xff]
      %v477 = vld [vmem:[%s411 + $0x1c8] sm:$0xff]
      %v478 = vld [vmem:[%s411 + $0x1d0] sm:$0xff]
      %v479 = vld [vmem:[%s411 + $0x1d8] sm:$0xff]
      %v480 = vld [vmem:[%s411 + $0x1e0] sm:$0xff]
      %v481 = vld [vmem:[%s411 + $0x1e8] sm:$0xff]
      %v482 = vld [vmem:[%s411 + $0x1f0] sm:$0xff]
      %v483 = vld [vmem:[%s411 + $0x1f8] sm:$0xff]
      %v484 = vld [vmem:[%s1] sm:$0xff]
      %v485 = vld [vmem:[%s1 + $0x8] sm:$0xff]
      %v486 = vld [vmem:[%s1 + $0x10] sm:$0xff]
      %v487 = vld [vmem:[%s1 + $0x18] sm:$0xff]
      %v488 = vld [vmem:[%s1 + $0x20] sm:$0xff]
      %v489 = vld [vmem:[%s1 + $0x28] sm:$0xff]
      %v490 = vld [vmem:[%s1 + $0x30] sm:$0xff]
      %v491 = vld [vmem:[%s1 + $0x38] sm:$0xff]
      %v492 = vld [vmem:[%s1 + $0x40] sm:$0xff]
      %v493 = vld [vmem:[%s1 + $0x48] sm:$0xff]
      %v494 = vld [vmem:[%s1 + $0x50] sm:$0xff]
      %v495 = vld [vmem:[%s1 + $0x58] sm:$0xff]
      %v496 = vld [vmem:[%s1 + $0x60] sm:$0xff]
      %v497 = vld [vmem:[%s1 + $0x68] sm:$0xff]
      %v498 = vld [vmem:[%s1 + $0x70] sm:$0xff]
      %v499 = vld [vmem:[%s1 + $0x78] sm:$0xff]
      %v500 = vld [vmem:[%s1 + $0x80] sm:$0xff]
      %v501 = vld [vmem:[%s1 + $0x88] sm:$0xff]
      %v502 = vld [vmem:[%s1 + $0x90] sm:$0xff]
      %v503 = vld [vmem:[%s1 + $0x98] sm:$0xff]
      %v504 = vld [vmem:[%s1 + $0xa0] sm:$0xff]
      %v505 = vld [vmem:[%s1 + $0xa8] sm:$0xff]
      %v506 = vld [vmem:[%s1 + $0xb0] sm:$0xff]
      %v507 = vld [vmem:[%s1 + $0xb8] sm:$0xff]
      %v508 = vld [vmem:[%s1 + $0xc0] sm:$0xff]
      %v509 = vld [vmem:[%s1 + $0xc8] sm:$0xff]
      %v510 = vld [vmem:[%s1 + $0xd0] sm:$0xff]
      %v511 = vld [vmem:[%s1 + $0xd8] sm:$0xff]
      %v512 = vld [vmem:[%s1 + $0xe0] sm:$0xff]
      %v513 = vld [vmem:[%s1 + $0xe8] sm:$0xff]
      %v514 = vld [vmem:[%s1 + $0xf0] sm:$0xff]
      %v515 = vld [vmem:[%s1 + $0xf8] sm:$0xff]
      %v516 = vld [vmem:[%s1 + $0x100] sm:$0xff]
      %v517 = vld [vmem:[%s1 + $0x108] sm:$0xff]
      %v518 = vld [vmem:[%s1 + $0x110] sm:$0xff]
      %v519 = vld [vmem:[%s1 + $0x118] sm:$0xff]
      %v520 = vld [vmem:[%s1 + $0x120] sm:$0xff]
      %v521 = vld [vmem:[%s1 + $0x128] sm:$0xff]
      %v522 = vld [vmem:[%s1 + $0x130] sm:$0xff]
      %v523 = vld [vmem:[%s1 + $0x138] sm:$0xff]
      %v524 = vld [vmem:[%s1 + $0x140] sm:$0xff]
      %v525 = vld [vmem:[%s1 + $0x148] sm:$0xff]
      %v526 = vld [vmem:[%s1 + $0x150] sm:$0xff]
      %v527 = vld [vmem:[%s1 + $0x158] sm:$0xff]
      %v528 = vld [vmem:[%s1 + $0x160] sm:$0xff]
      %v529 = vld [vmem:[%s1 + $0x168] sm:$0xff]
      %v530 = vld [vmem:[%s1 + $0x170] sm:$0xff]
      %v531 = vld [vmem:[%s1 + $0x178] sm:$0xff]
      %v532 = vld [vmem:[%s1 + $0x180] sm:$0xff]
      %v533 = vld [vmem:[%s1 + $0x188] sm:$0xff]
      %v534 = vld [vmem:[%s1 + $0x190] sm:$0xff]
      %v535 = vld [vmem:[%s1 + $0x198] sm:$0xff]
      %v536 = vld [vmem:[%s1 + $0x1a0] sm:$0xff]
      %v537 = vld [vmem:[%s1 + $0x1a8] sm:$0xff]
      %v538 = vld [vmem:[%s1 + $0x1b0] sm:$0xff]
      %v539 = vld [vmem:[%s1 + $0x1b8] sm:$0xff]
      %v540 = vld [vmem:[%s1 + $0x1c0] sm:$0xff]
      %v541 = vld [vmem:[%s1 + $0x1c8] sm:$0xff]
      %v542 = vld [vmem:[%s1 + $0x1d0] sm:$0xff]
      %v543 = vld [vmem:[%s1 + $0x1d8] sm:$0xff]
      %v544 = vld [vmem:[%s1 + $0x1e0] sm:$0xff]
      %v545 = vld [vmem:[%s1 + $0x1e8] sm:$0xff]
      %v546 = vld [vmem:[%s1 + $0x1f0] sm:$0xff]
      %v547 = vld [vmem:[%s1 + $0x1f8] sm:$0xff]
      %v548 = vld [vmem:[%s2] sm:$0xff]
      %v549 = vld [vmem:[%s2 + $0x8] sm:$0xff]
      %v550 = vld [vmem:[%s2 + $0x10] sm:$0xff]
      %v551 = vld [vmem:[%s2 + $0x18] sm:$0xff]
      %553 = vset.pattern.permute.xlu0 0
      %554 = vperm.xlu0 %553, %v548
      %v555 = vpop.permute.xlu0 %554
      %558 = vset.pattern.permute.xlu0 0
      %559 = vperm.xlu0 %558, %v549
      %v560 = vpop.permute.xlu0 %559
      %563 = vset.pattern.permute.xlu0 0
      %564 = vperm.xlu0 %563, %v550
      %v565 = vpop.permute.xlu0 %564
      %568 = vset.pattern.permute.xlu0 0
      %569 = vperm.xlu0 %568, %v551
      %v570 = vpop.permute.xlu0 %569
      %572 = vxpose.xlu0.b32.start [1/16] %v484, 128
      %573 = vxpose.xlu0.b32.cont [2/16] %v485, 128
      %574 = vxpose.xlu0.b32.cont [3/16] %v486, 128
      %575 = vxpose.xlu0.b32.cont [4/16] %v487, 128
      %576 = vxpose.xlu0.b32.cont [5/16] %v488, 128
      %577 = vxpose.xlu0.b32.cont [6/16] %v489, 128
      %578 = vxpose.xlu0.b32.cont [7/16] %v490, 128
      %579 = vxpose.xlu0.b32.cont [8/16] %v491, 128
      %580 = vxpose.xlu0.b32.cont [9/16] %v492, 128
      %581 = vxpose.xlu0.b32.cont [10/16] %v493, 128
      %582 = vxpose.xlu0.b32.cont [11/16] %v494, 128
      %583 = vxpose.xlu0.b32.cont [12/16] %v495, 128
      %584 = vxpose.xlu0.b32.cont [13/16] %v496, 128
      %585 = vxpose.xlu0.b32.cont [14/16] %v497, 128
      %586 = vxpose.xlu0.b32.cont [15/16] %v498, 128
      %587 = vxpose.xlu0.b32.end [16/16] %v499, 128
      %v588 = vpop.trf.xlu0
      %v589 = vpop.trf.xlu0
      %v590 = vpop.trf.xlu0
      %v591 = vpop.trf.xlu0
      %v592 = vpop.trf.xlu0
      %v593 = vpop.trf.xlu0
      %v594 = vpop.trf.xlu0
      %v595 = vpop.trf.xlu0
      %v596 = vpop.trf.xlu0
      %v597 = vpop.trf.xlu0
      %v598 = vpop.trf.xlu0
      %v599 = vpop.trf.xlu0
      %v600 = vpop.trf.xlu0
      %v601 = vpop.trf.xlu0
      %v602 = vpop.trf.xlu0
      %v603 = vpop.trf.xlu0
      %604 = vxpose.xlu0.b32.start [1/16] %v500, 128
      %605 = vxpose.xlu0.b32.cont [2/16] %v501, 128
      %606 = vxpose.xlu0.b32.cont [3/16] %v502, 128
      %607 = vxpose.xlu0.b32.cont [4/16] %v503, 128
      %608 = vxpose.xlu0.b32.cont [5/16] %v504, 128
      %609 = vxpose.xlu0.b32.cont [6/16] %v505, 128
      %610 = vxpose.xlu0.b32.cont [7/16] %v506, 128
      %611 = vxpose.xlu0.b32.cont [8/16] %v507, 128
      %612 = vxpose.xlu0.b32.cont [9/16] %v508, 128
      %613 = vxpose.xlu0.b32.cont [10/16] %v509, 128
      %614 = vxpose.xlu0.b32.cont [11/16] %v510, 128
      %615 = vxpose.xlu0.b32.cont [12/16] %v511, 128
      %616 = vxpose.xlu0.b32.cont [13/16] %v512, 128
      %617 = vxpose.xlu0.b32.cont [14/16] %v513, 128
      %618 = vxpose.xlu0.b32.cont [15/16] %v514, 128
      %619 = vxpose.xlu0.b32.end [16/16] %v515, 128
      %v620 = vpop.trf.xlu0
      %v621 = vpop.trf.xlu0
      %v622 = vpop.trf.xlu0
      %v623 = vpop.trf.xlu0
      %v624 = vpop.trf.xlu0
      %v625 = vpop.trf.xlu0
      %v626 = vpop.trf.xlu0
      %v627 = vpop.trf.xlu0
      %v628 = vpop.trf.xlu0
      %v629 = vpop.trf.xlu0
      %v630 = vpop.trf.xlu0
      %v631 = vpop.trf.xlu0
      %v632 = vpop.trf.xlu0
      %v633 = vpop.trf.xlu0
      %v634 = vpop.trf.xlu0
      %v635 = vpop.trf.xlu0
      %636 = vxpose.xlu0.b32.start [1/16] %v516, 128
      %637 = vxpose.xlu0.b32.cont [2/16] %v517, 128
      %638 = vxpose.xlu0.b32.cont [3/16] %v518, 128
      %639 = vxpose.xlu0.b32.cont [4/16] %v519, 128
      %640 = vxpose.xlu0.b32.cont [5/16] %v520, 128
      %641 = vxpose.xlu0.b32.cont [6/16] %v521, 128
      %642 = vxpose.xlu0.b32.cont [7/16] %v522, 128
      %643 = vxpose.xlu0.b32.cont [8/16] %v523, 128
      %644 = vxpose.xlu0.b32.cont [9/16] %v524, 128
      %645 = vxpose.xlu0.b32.cont [10/16] %v525, 128
      %646 = vxpose.xlu0.b32.cont [11/16] %v526, 128
      %647 = vxpose.xlu0.b32.cont [12/16] %v527, 128
      %648 = vxpose.xlu0.b32.cont [13/16] %v528, 128
      %649 = vxpose.xlu0.b32.cont [14/16] %v529, 128
      %650 = vxpose.xlu0.b32.cont [15/16] %v530, 128
      %651 = vxpose.xlu0.b32.end [16/16] %v531, 128
      %v652 = vpop.trf.xlu0
      %v653 = vpop.trf.xlu0
      %v654 = vpop.trf.xlu0
      %v655 = vpop.trf.xlu0
      %v656 = vpop.trf.xlu0
      %v657 = vpop.trf.xlu0
      %v658 = vpop.trf.xlu0
      %v659 = vpop.trf.xlu0
      %v660 = vpop.trf.xlu0
      %v661 = vpop.trf.xlu0
      %v662 = vpop.trf.xlu0
      %v663 = vpop.trf.xlu0
      %v664 = vpop.trf.xlu0
      %v665 = vpop.trf.xlu0
      %v666 = vpop.trf.xlu0
      %v667 = vpop.trf.xlu0
      %668 = vxpose.xlu0.b32.start [1/16] %v532, 128
      %669 = vxpose.xlu0.b32.cont [2/16] %v533, 128
      %670 = vxpose.xlu0.b32.cont [3/16] %v534, 128
      %671 = vxpose.xlu0.b32.cont [4/16] %v535, 128
      %672 = vxpose.xlu0.b32.cont [5/16] %v536, 128
      %673 = vxpose.xlu0.b32.cont [6/16] %v537, 128
      %674 = vxpose.xlu0.b32.cont [7/16] %v538, 128
      %675 = vxpose.xlu0.b32.cont [8/16] %v539, 128
      %676 = vxpose.xlu0.b32.cont [9/16] %v540, 128
      %677 = vxpose.xlu0.b32.cont [10/16] %v541, 128
      %678 = vxpose.xlu0.b32.cont [11/16] %v542, 128
      %679 = vxpose.xlu0.b32.cont [12/16] %v543, 128
      %680 = vxpose.xlu0.b32.cont [13/16] %v544, 128
      %681 = vxpose.xlu0.b32.cont [14/16] %v545, 128
      %682 = vxpose.xlu0.b32.cont [15/16] %v546, 128
      %683 = vxpose.xlu0.b32.end [16/16] %v547, 128
      %v684 = vpop.trf.xlu0
      %v685 = vpop.trf.xlu0
      %v686 = vpop.trf.xlu0
      %v687 = vpop.trf.xlu0
      %v688 = vpop.trf.xlu0
      %v689 = vpop.trf.xlu0
      %v690 = vpop.trf.xlu0
      %v691 = vpop.trf.xlu0
      %v692 = vpop.trf.xlu0
      %v693 = vpop.trf.xlu0
      %v694 = vpop.trf.xlu0
      %v695 = vpop.trf.xlu0
      %v696 = vpop.trf.xlu0
      %v697 = vpop.trf.xlu0
      %v698 = vpop.trf.xlu0
      %v699 = vpop.trf.xlu0
      %700 = vmatprep.subr.mxu0 0.0
      %701 = vmatpush1.msra.mxu0 %v435
      %702 = vmatprep.subr.mxu0 0.0
      %703 = vmatpush1.msra.mxu0 %v434
      %704 = vmatprep.subr.mxu0 0.0
      %705 = vmatpush1.msra.mxu0 %v433
      %706 = vmatprep.subr.mxu0 0.0
      %707 = vmatpush1.msra.mxu0 %v432
      %708 = vmatprep.subr.mxu0 0.0
      %709 = vmatpush1.msra.mxu0 %v431
      %710 = vmatprep.subr.mxu0 0.0
      %711 = vmatpush1.msra.mxu0 %v430
      %712 = vmatprep.subr.mxu0 0.0
      %713 = vmatpush1.msra.mxu0 %v429
      %714 = vmatprep.subr.mxu0 0.0
      %715 = vmatpush1.msra.mxu0 %v428
      %716 = vmatprep.subr.mxu0 0.0
      %717 = vmatpush1.msra.mxu0 %v427
      %718 = vmatprep.subr.mxu0 0.0
      %719 = vmatpush1.msra.mxu0 %v426
      %720 = vmatprep.subr.mxu0 0.0
      %721 = vmatpush1.msra.mxu0 %v425
      %722 = vmatprep.subr.mxu0 0.0
      %723 = vmatpush1.msra.mxu0 %v424
      %724 = vmatprep.subr.mxu0 0.0
      %725 = vmatpush1.msra.mxu0 %v423
      %726 = vmatprep.subr.mxu0 0.0
      %727 = vmatpush1.msra.mxu0 %v422
      %728 = vmatprep.subr.mxu0 0.0
      %729 = vmatpush1.msra.mxu0 %v421
      %730 = vmatprep.subr.mxu0 0.0
      %731 = vmatpush1.msra.mxu0 %v420
      %732 = vmatprep.subr.mxu0 0.0
      %733 = vmatpush2.msra.mxu0 %v451
      %734 = vmatprep.subr.mxu0 0.0
      %735 = vmatpush2.msra.mxu0 %v450
      %736 = vmatprep.subr.mxu0 0.0
      %737 = vmatpush2.msra.mxu0 %v449
      %738 = vmatprep.subr.mxu0 0.0
      %739 = vmatpush2.msra.mxu0 %v448
      %740 = vmatprep.subr.mxu0 0.0
      %741 = vmatpush2.msra.mxu0 %v447
      %742 = vmatprep.subr.mxu0 0.0
      %743 = vmatpush2.msra.mxu0 %v446
      %744 = vmatprep.subr.mxu0 0.0
      %745 = vmatpush2.msra.mxu0 %v445
      %746 = vmatprep.subr.mxu0 0.0
      %747 = vmatpush2.msra.mxu0 %v444
      %748 = vmatprep.subr.mxu0 0.0
      %749 = vmatpush2.msra.mxu0 %v443
      %750 = vmatprep.subr.mxu0 0.0
      %751 = vmatpush2.msra.mxu0 %v442
      %752 = vmatprep.subr.mxu0 0.0
      %753 = vmatpush2.msra.mxu0 %v441
      %754 = vmatprep.subr.mxu0 0.0
      %755 = vmatpush2.msra.mxu0 %v440
      %756 = vmatprep.subr.mxu0 0.0
      %757 = vmatpush2.msra.mxu0 %v439
      %758 = vmatprep.subr.mxu0 0.0
      %759 = vmatpush2.msra.mxu0 %v438
      %760 = vmatprep.subr.mxu0 0.0
      %761 = vmatpush2.msra.mxu0 %v437
      %762 = vmatprep.subr.mxu0 0.0
      %763 = vmatpush2.msra.mxu0 %v436
      %764 = vmatprep.mubr.f32.mxu0 %v620
      %765 = vmatmul.mubr.f32.gmra.mxu0 %v588
      %v766 = vpop.f32.mrf.mxu0
      %v767 = vadd.f32 %v555, %v766
      %v768 = vpop.f32.mrf.mxu0
      %769 = vmatprep.mubr.f32.mxu0 %v621
      %770 = vmatmul.mubr.f32.gmra.mxu0 %v589
      %v771 = vpop.f32.mrf.mxu0
      %v772 = vadd.f32 %v560, %v771
      %v773 = vpop.f32.mrf.mxu0
      %774 = vmatprep.mubr.f32.mxu0 %v622
      %775 = vmatmul.mubr.f32.gmra.mxu0 %v590
      %v776 = vpop.f32.mrf.mxu0
      %v777 = vadd.f32 %v565, %v776
      %v778 = vpop.f32.mrf.mxu0
      %779 = vmatprep.mubr.f32.mxu0 %v623
      %780 = vmatmul.mubr.f32.gmra.mxu0 %v591
      %v781 = vpop.f32.mrf.mxu0
      %v782 = vadd.f32 %v570, %v781
      %v783 = vpop.f32.mrf.mxu0
      %784 = vdwg.mxu0
      %785 = vmatprep.subr.mxu0 0.0
      %786 = vmatpush1.msra.mxu0 %v467
      %787 = vmatprep.subr.mxu0 0.0
      %788 = vmatpush1.msra.mxu0 %v466
      %789 = vmatprep.subr.mxu0 0.0
      %790 = vmatpush1.msra.mxu0 %v465
      %791 = vmatprep.subr.mxu0 0.0
      %792 = vmatpush1.msra.mxu0 %v464
      %793 = vmatprep.subr.mxu0 0.0
      %794 = vmatpush1.msra.mxu0 %v463
      %795 = vmatprep.subr.mxu0 0.0
      %796 = vmatpush1.msra.mxu0 %v462
      %797 = vmatprep.subr.mxu0 0.0
      %798 = vmatpush1.msra.mxu0 %v461
      %799 = vmatprep.subr.mxu0 0.0
      %800 = vmatpush1.msra.mxu0 %v460
      %801 = vmatprep.subr.mxu0 0.0
      %802 = vmatpush1.msra.mxu0 %v459
      %803 = vmatprep.subr.mxu0 0.0
      %804 = vmatpush1.msra.mxu0 %v458
      %805 = vmatprep.subr.mxu0 0.0
      %806 = vmatpush1.msra.mxu0 %v457
      %807 = vmatprep.subr.mxu0 0.0
      %808 = vmatpush1.msra.mxu0 %v456
      %809 = vmatprep.subr.mxu0 0.0
      %810 = vmatpush1.msra.mxu0 %v455
      %811 = vmatprep.subr.mxu0 0.0
      %812 = vmatpush1.msra.mxu0 %v454
      %813 = vmatprep.subr.mxu0 0.0
      %814 = vmatpush1.msra.mxu0 %v453
      %815 = vmatprep.subr.mxu0 0.0
      %816 = vmatpush1.msra.mxu0 %v452
      %817 = vmatprep.subr.mxu0 0.0
      %818 = vmatpush2.msra.mxu0 %v483
      %819 = vmatprep.subr.mxu0 0.0
      %820 = vmatpush2.msra.mxu0 %v482
      %821 = vmatprep.subr.mxu0 0.0
      %822 = vmatpush2.msra.mxu0 %v481
      %823 = vmatprep.subr.mxu0 0.0
      %824 = vmatpush2.msra.mxu0 %v480
      %825 = vmatprep.subr.mxu0 0.0
      %826 = vmatpush2.msra.mxu0 %v479
      %827 = vmatprep.subr.mxu0 0.0
      %828 = vmatpush2.msra.mxu0 %v478
      %829 = vmatprep.subr.mxu0 0.0
      %830 = vmatpush2.msra.mxu0 %v477
      %831 = vmatprep.subr.mxu0 0.0
      %832 = vmatpush2.msra.mxu0 %v476
      %833 = vmatprep.subr.mxu0 0.0
      %834 = vmatpush2.msra.mxu0 %v475
      %835 = vmatprep.subr.mxu0 0.0
      %836 = vmatpush2.msra.mxu0 %v474
      %837 = vmatprep.subr.mxu0 0.0
      %838 = vmatpush2.msra.mxu0 %v473
      %839 = vmatprep.subr.mxu0 0.0
      %840 = vmatpush2.msra.mxu0 %v472
      %841 = vmatprep.subr.mxu0 0.0
      %842 = vmatpush2.msra.mxu0 %v471
      %843 = vmatprep.subr.mxu0 0.0
      %844 = vmatpush2.msra.mxu0 %v470
      %845 = vmatprep.subr.mxu0 0.0
      %846 = vmatpush2.msra.mxu0 %v469
      %847 = vmatprep.subr.mxu0 0.0
      %848 = vmatpush2.msra.mxu0 %v468
      %849 = vmatprep.mubr.f32.mxu0 %v684
      %850 = vmatmul.mubr.f32.gmra.mxu0 %v652
      %v851 = vpop.f32.mrf.mxu0
      %v852 = vadd.f32 %v767, %v851
      %v853 = vpop.f32.mrf.mxu0
      %854 = vmatprep.mubr.f32.mxu0 %v685
      %855 = vmatmul.mubr.f32.gmra.mxu0 %v653
      %v856 = vpop.f32.mrf.mxu0
      %v857 = vadd.f32 %v772, %v856
      %v858 = vpop.f32.mrf.mxu0
      %859 = vmatprep.mubr.f32.mxu0 %v686
      %860 = vmatmul.mubr.f32.gmra.mxu0 %v654
      %v861 = vpop.f32.mrf.mxu0
      %v862 = vadd.f32 %v777, %v861
      %v863 = vpop.f32.mrf.mxu0
      %864 = vmatprep.mubr.f32.mxu0 %v687
      %865 = vmatmul.mubr.f32.gmra.mxu0 %v655
      %v866 = vpop.f32.mrf.mxu0
      %v867 = vadd.f32 %v782, %v866
      %v868 = vpop.f32.mrf.mxu0
      %869 = vdwg.mxu0
      %vm870 = vcmask 130048
      %871 = vst.msk [vmem:[%s419] sm:$0xff] %vm870, %v852
      %872 = vst.msk [vmem:[%s419 + $0x8] sm:$0xff] %vm870, %v857
      %873 = vst.msk [vmem:[%s419 + $0x10] sm:$0xff] %vm870, %v862
      %874 = vst.msk [vmem:[%s419 + $0x18] sm:$0xff] %vm870, %v867
      %v875 = vld [vmem:[%s3] sm:$0xff]
      %v876 = vld [vmem:[%s3 + $0x8] sm:$0xff]
      %v877 = vld [vmem:[%s3 + $0x10] sm:$0xff]
      %v878 = vld [vmem:[%s3 + $0x18] sm:$0xff]
      %880 = vset.pattern.permute.xlu0 0
      %881 = vperm.xlu0 %880, %v875
      %v882 = vpop.permute.xlu0 %881
      %885 = vset.pattern.permute.xlu0 0
      %886 = vperm.xlu0 %885, %v876
      %v887 = vpop.permute.xlu0 %886
      %890 = vset.pattern.permute.xlu0 0
      %891 = vperm.xlu0 %890, %v877
      %v892 = vpop.permute.xlu0 %891
      %895 = vset.pattern.permute.xlu0 0
      %896 = vperm.xlu0 %895, %v878
      %v897 = vpop.permute.xlu0 %896
      %v899 = vmul.f32 %v852, %v882
      %v900 = vmul.f32 %v857, %v887
      %v901 = vmul.f32 %v862, %v892
      %v902 = vmul.f32 %v867, %v897
      %v903 = vld [vmem:[%s4] sm:$0xff]
      %v904 = vld [vmem:[%s4 + $0x8] sm:$0xff]
      %v905 = vld [vmem:[%s4 + $0x10] sm:$0xff]
      %v906 = vld [vmem:[%s4 + $0x18] sm:$0xff]
      %908 = vset.pattern.permute.xlu0 0
      %909 = vperm.xlu0 %908, %v903
      %v910 = vpop.permute.xlu0 %909
      %913 = vset.pattern.permute.xlu0 0
      %914 = vperm.xlu0 %913, %v904
      %v915 = vpop.permute.xlu0 %914
      %918 = vset.pattern.permute.xlu0 0
      %919 = vperm.xlu0 %918, %v905
      %v920 = vpop.permute.xlu0 %919
      %923 = vset.pattern.permute.xlu0 0
      %924 = vperm.xlu0 %923, %v906
      %v925 = vpop.permute.xlu0 %924
      %v927 = vadd.f32 %v899, %v910
      %v928 = vadd.f32 %v900, %v915
      %v929 = vadd.f32 %v901, %v920
      %v930 = vadd.f32 %v902, %v925
      %v931 = vmax.f32 %v927, 0.0
      %v932 = vmax.f32 %v928, 0.0
      %v933 = vmax.f32 %v929, 0.0
      %v934 = vmax.f32 %v930, 0.0
      %v935 = vld [vmem:[%s5] sm:$0xff]
      %v936 = vld [vmem:[%s5 + $0x8] sm:$0xff]
      %v937 = vld [vmem:[%s5 + $0x10] sm:$0xff]
      %v938 = vld [vmem:[%s5 + $0x18] sm:$0xff]
      %v939 = vld [vmem:[%s6] sm:$0xff]
      %v940 = vld [vmem:[%s6 + $0x8] sm:$0xff]
      %942 = vset.pattern.permute.xlu0 0
      %943 = vperm.xlu0 %942, %v939
      %v944 = vpop.permute.xlu0 %943
      %947 = vset.pattern.permute.xlu0 0
      %948 = vperm.xlu0 %947, %v940
      %v949 = vpop.permute.xlu0 %948
      %951 = vxpose.xlu0.b32.start [1/16] %v935, 128
      %952 = vxpose.xlu0.b32.cont [2/16] %v936, 128
      %953 = vxpose.xlu0.b32.cont [3/16] %v937, 128
      %954 = vxpose.xlu0.b32.cont [4/16] %v938, 128
      %955 = vxpose.xlu0.b32.cont [5/16] 0.0, 128
      %956 = vxpose.xlu0.b32.cont [6/16] 0.0, 128
      %957 = vxpose.xlu0.b32.cont [7/16] 0.0, 128
      %958 = vxpose.xlu0.b32.cont [8/16] 0.0, 128
      %959 = vxpose.xlu0.b32.cont [9/16] 0.0, 128
      %960 = vxpose.xlu0.b32.cont [10/16] 0.0, 128
      %961 = vxpose.xlu0.b32.cont [11/16] 0.0, 128
      %962 = vxpose.xlu0.b32.cont [12/16] 0.0, 128
      %963 = vxpose.xlu0.b32.cont [13/16] 0.0, 128
      %964 = vxpose.xlu0.b32.cont [14/16] 0.0, 128
      %965 = vxpose.xlu0.b32.cont [15/16] 0.0, 128
      %966 = vxpose.xlu0.b32.end [16/16] 0.0, 128
      %v967 = vpop.trf.xlu0
      %v968 = vpop.trf.xlu0
      %v969 = vpop.trf.xlu0
      %v970 = vpop.trf.xlu0
      %v971 = vpop.trf.xlu0
      %v972 = vpop.trf.xlu0
      %v973 = vpop.trf.xlu0
      %v974 = vpop.trf.xlu0
      %v975 = vpop.trf.xlu0
      %v976 = vpop.trf.xlu0
      %v977 = vpop.trf.xlu0
      %v978 = vpop.trf.xlu0
      %v979 = vpop.trf.xlu0
      %v980 = vpop.trf.xlu0
      %v981 = vpop.trf.xlu0
      %v982 = vpop.trf.xlu0
      %vm983 = vcmask 261120
      %v985 = vsel %vm983, %v967, 0
      %v988 = vsel %vm983, %v968, 0
      %990 = vmatprep.subr.mxu0 0.0
      %991 = vmatpush1.msra.mxu0 0.0
      %992 = vmatprep.subr.mxu0 0.0
      %993 = vmatpush1.msra.mxu0 0.0
      %994 = vmatprep.subr.mxu0 0.0
      %995 = vmatpush1.msra.mxu0 0.0
      %996 = vmatprep.subr.mxu0 0.0
      %997 = vmatpush1.msra.mxu0 0.0
      %998 = vmatprep.subr.mxu0 0.0
      %999 = vmatpush1.msra.mxu0 0.0
      %1000 = vmatprep.subr.mxu0 0.0
      %1001 = vmatpush1.msra.mxu0 0.0
      %1002 = vmatprep.subr.mxu0 0.0
      %1003 = vmatpush1.msra.mxu0 0.0
      %1004 = vmatprep.subr.mxu0 0.0
      %1005 = vmatpush1.msra.mxu0 0.0
      %1006 = vmatprep.subr.mxu0 0.0
      %1007 = vmatpush1.msra.mxu0 0.0
      %1008 = vmatprep.subr.mxu0 0.0
      %1009 = vmatpush1.msra.mxu0 0.0
      %1010 = vmatprep.subr.mxu0 0.0
      %1011 = vmatpush1.msra.mxu0 0.0
      %1012 = vmatprep.subr.mxu0 0.0
      %1013 = vmatpush1.msra.mxu0 0.0
      %1014 = vmatprep.subr.mxu0 0.0
      %1015 = vmatpush1.msra.mxu0 %v934
      %1016 = vmatprep.subr.mxu0 0.0
      %1017 = vmatpush1.msra.mxu0 %v933
      %1018 = vmatprep.subr.mxu0 0.0
      %1019 = vmatpush1.msra.mxu0 %v932
      %1020 = vmatprep.subr.mxu0 0.0
      %1021 = vmatpush1.msra.mxu0 %v931
      %1022 = vmatprep.subr.mxu0 0.0
      %1023 = vmatpush2.msra.mxu0 0.0
      %1024 = vmatprep.subr.mxu0 0.0
      %1025 = vmatpush2.msra.mxu0 0.0
      %1026 = vmatprep.subr.mxu0 0.0
      %1027 = vmatpush2.msra.mxu0 0.0
      %1028 = vmatprep.subr.mxu0 0.0
      %1029 = vmatpush2.msra.mxu0 0.0
      %1030 = vmatprep.subr.mxu0 0.0
      %1031 = vmatpush2.msra.mxu0 0.0
      %1032 = vmatprep.subr.mxu0 0.0
      %1033 = vmatpush2.msra.mxu0 0.0
      %1034 = vmatprep.subr.mxu0 0.0
      %1035 = vmatpush2.msra.mxu0 0.0
      %1036 = vmatprep.subr.mxu0 0.0
      %1037 = vmatpush2.msra.mxu0 0.0
      %1038 = vmatprep.subr.mxu0 0.0
      %1039 = vmatpush2.msra.mxu0 0.0
      %1040 = vmatprep.subr.mxu0 0.0
      %1041 = vmatpush2.msra.mxu0 0.0
      %1042 = vmatprep.subr.mxu0 0.0
      %1043 = vmatpush2.msra.mxu0 0.0
      %1044 = vmatprep.subr.mxu0 0.0
      %1045 = vmatpush2.msra.mxu0 0.0
      %1046 = vmatprep.subr.mxu0 0.0
      %1047 = vmatpush2.msra.mxu0 0.0
      %1048 = vmatprep.subr.mxu0 0.0
      %1049 = vmatpush2.msra.mxu0 0.0
      %1050 = vmatprep.subr.mxu0 0.0
      %1051 = vmatpush2.msra.mxu0 0.0
      %1052 = vmatprep.subr.mxu0 0.0
      %1053 = vmatpush2.msra.mxu0 0.0
      %1054 = vmatprep.mubr.f32.mxu0 0.0
      %1055 = vmatmul.mubr.f32.gmra.mxu0 %v985
      %v1056 = vpop.f32.mrf.mxu0
      %v1057 = vadd.f32 %v944, %v1056
      %v1058 = vpop.f32.mrf.mxu0
      %1059 = vmatprep.mubr.f32.mxu0 0.0
      %1060 = vmatmul.mubr.f32.gmra.mxu0 %v988
      %v1061 = vpop.f32.mrf.mxu0
      %v1062 = vadd.f32 %v949, %v1061
      %v1063 = vpop.f32.mrf.mxu0
      %1064 = vdwg.mxu0
      %1065 = vst.msk [vmem:[%s419 + $0x20] sm:$0xff] %vm870, %v1057
      %1066 = vst.msk [vmem:[%s419 + $0x28] sm:$0xff] %vm870, %v1062
      %v1067 = vld [vmem:[%s7] sm:$0xff]
      %v1068 = vld [vmem:[%s7 + $0x8] sm:$0xff]
      %1070 = vset.pattern.permute.xlu0 0
      %1071 = vperm.xlu0 %1070, %v1067
      %v1072 = vpop.permute.xlu0 %1071
      %1075 = vset.pattern.permute.xlu0 0
      %1076 = vperm.xlu0 %1075, %v1068
      %v1077 = vpop.permute.xlu0 %1076
      %v1079 = vmul.f32 %v1057, %v1072
      %v1080 = vmul.f32 %v1062, %v1077
      %v1081 = vld [vmem:[%s8] sm:$0xff]
      %v1082 = vld [vmem:[%s8 + $0x8] sm:$0xff]
      %1084 = vset.pattern.permute.xlu0 0
      %1085 = vperm.xlu0 %1084, %v1081
      %v1086 = vpop.permute.xlu0 %1085
      %1089 = vset.pattern.permute.xlu0 0
      %1090 = vperm.xlu0 %1089, %v1082
      %v1091 = vpop.permute.xlu0 %1090
      %v1093 = vadd.f32 %v1079, %v1086
      %v1094 = vadd.f32 %v1080, %v1091
      %v1095 = vmax.f32 %v1093, 0.0
      %v1096 = vmax.f32 %v1094, 0.0
      %v1097 = vld [vmem:[%s9] sm:$0xff]
      %v1098 = vld [vmem:[%s9 + $0x8] sm:$0xff]
      %1100 = vset.pattern.permute.xlu0 0
      %1101 = vperm.xlu0 %1100, %v1097
      %v1102 = vpop.permute.xlu0 %1101
      %1105 = vset.pattern.permute.xlu0 0
      %1106 = vperm.xlu0 %1105, %v1098
      %v1107 = vpop.permute.xlu0 %1106
      %v1109 = vmul.f32 %v1095, %v1102
      %v1110 = vmul.f32 %v1096, %v1107
      %v1111 = vsel %vm870, %v1109, 0.0
      %v1112 = vsel %vm870, %v1110, 0.0
      %v1113 = vadd.f32 %v1111, %v1112
      %v1114 = vrot.slane %v1113, 4
      %v1115 = vadd.f32 %v1113, %v1114
      %v1116 = vrot.slane %v1115, 2
      %v1117 = vadd.f32 %v1115, %v1116
      %v1118 = vrot.slane %v1117, 1
      %v1119 = vadd.f32 %v1117, %v1118
      %v1120 = vld [vmem:[#allocation2] sm:$0x1]
      %1122 = vset.pattern.permute.xlu0 0
      %1123 = vperm.xlu0 %1122, %v1120
      %v1124 = vpop.permute.xlu0 %1123
      %v1126 = vlaneseq
      %v1127 = vshrl.u32 %v1126, 7
      %v1128 = vsub.s32 0, %v1127
      %v1129 = vrot.slane %v1124, %v1128
      %v1130 = vadd.f32 %v1119, %v1129
      %v1131 = vxor.u32 %v1130, 2147483648
      %v1132 = vmul.f32 %v1131, 1.442695
      %v1133 = vpow.pop %v1132
      %v1134 = vadd.f32 %v1133, 1.0
      %v1135 = vrcp.pop %v1134
      %v1136 = vmul.f32 1.0, %v1135
      %vm1137 = vcmask 122880
      %1138 = vst.msk [vmem:[%s419 + $0x30] sm:$0x1] %vm1137, %v1136
      %vm1139 = vcmask 129024
      %1140 = vst.msk [vmem:[%s419 + $0x31] sm:$0x7f] %vm1139, 0.0
      %p1141 = scmp.lt.s32.totalorder %s28, 1
      %s1142 = scalar_select %p1141, %s28, 1
      %p1143 = scmp.lt.s32.totalorder %s29, 0
      %s1144 = scalar_select %p1143, %s29, 0
      %s1145 = smul.addr %s1142, 7
      %s1146 = sadd.s32 %s1144, %s1145
      %s1147 = smul.addr %s1146, 8
      %s1148 = scalar_lea.vmem %s11, %s1147
      // Predicated region
      $region65: #{tpu_custom_call.1} parent=63 // pred_check
        %p1149 = pneg %p294
      $region66: #{tpu_custom_call.1} parent=63 // pred_check_branch
        %1151 = sbr.rel (%p1149) target = $region68
      $region67: #{tpu_custom_call.1} parent=63 // pred_region
        _
      $region68: #{tpu_custom_call.1} parent=63 // pred_fallthru
        _
    $region64: #{tpu_custom_call.1} parent=5 // pred_fallthru
      _
    %p1152 = scmp.le.s32.totalorder 2, %s19
    // Predicated region
    $region69: #{tpu_custom_call.1} parent=5 // pred_check
      %p1153 = pneg %p1152
    $region70: #{tpu_custom_call.1} parent=5 // pred_check_branch
      %1155 = sbr.rel (%p1153) target = $region72
    $region71: #{tpu_custom_call.1} parent=5 // pred_region
      %s1156 = ssub.s32 %s19, 2
      // Predicated region
      $region73: #{tpu_custom_call.1} parent=71 // pred_check
        %p1157 = pneg %p300
      $region74: #{tpu_custom_call.1} parent=71 // pred_check_branch
        %1159 = sbr.rel (%p1157) target = $region76
      $region75: #{tpu_custom_call.1} parent=71 // pred_region
        %p1160 = scmp.lt.s32.totalorder %s30, 1
        %s1161 = scalar_select %p1160, %s30, 1
        %p1162 = scmp.lt.s32.totalorder %s31, 0
        %s1163 = scalar_select %p1162, %s31, 0
        %s1164 = smul.addr %s1161, 7
        %s1165 = sadd.s32 %s1163, %s1164
        %s1166 = smul.addr %s1165, 8
        %s1167 = scalar_lea.vmem %s11, %s1166
      $region76: #{tpu_custom_call.1} parent=71 // pred_fallthru
        _
    $region72: #{tpu_custom_call.1} parent=5 // pred_fallthru
      _
  $region6: #{tpu_custom_call.1} parent=0 // loop_footer
    %s23 = sadd.s32 1, %s19
  $region7: #{tpu_custom_call.1} parent=0 // loop_footer_branch
    %18 = sbr.rel target = $region3
  $region8: #{tpu_custom_call.1} parent=0 // loop_exit
    _

</llo_original>
